<compile_context>
chip_gen: v7x
topology: tpu7x:2x2x1
jax: 0.10.0
libtpu: 0.0.40
codegen_flags: <defaults>
</compile_context>

<pallas_src>
import functools

import jax
import jax.numpy as jnp
from jax.experimental import pallas as pl
from jax.experimental.pallas import tpu as pltpu


# --------------------------------------------------------------------------- #
# Hardware-aware configuration
# --------------------------------------------------------------------------- #
def _hw_config():
    """Generation-aware tiling / VMEM / epilogue choices (safe fallbacks)."""
    try:
        kind = jax.devices()[0].device_kind.lower()
    except Exception:  # pragma: no cover - defensive
        kind = ""
    is_v5e = ("v5 lite" in kind) or ("v5e" in kind) or ("v5litepod" in kind)
    is_v6 = ("v6" in kind)
    is_v7 = ("v7" in kind) or ("tpu7" in kind)
    if is_v7:
        # 64 MiB physical VMEM per TC, 2 TCs/chip -> keep the 32 MiB scoped
        # limit, 4096-row tiles, and make sure big batches use >= 2 tiles.
        return dict(vmem_limit=32 * 1024 * 1024, block_b=4096,
                    two_core=True, bf16_valu=True)
    if is_v6:
        # 128 MiB physical VMEM -> 64 MiB scoped, big tiles, bf16 VALU ok.
        return dict(vmem_limit=64 * 1024 * 1024, block_b=8192,
                    two_core=False, bf16_valu=True)
    if is_v5e:
        # 128 MiB physical VMEM, but no bf16 vector path -> f32 epilogue.
        return dict(vmem_limit=64 * 1024 * 1024, block_b=8192,
                    two_core=False, bf16_valu=False)
    # Unknown / older generation: conservative but still 4x the old default.
    return dict(vmem_limit=32 * 1024 * 1024, block_b=2048,
                two_core=False, bf16_valu=False)


def _epilogue_dtype(mm_dtype):
    cfg = _hw_config()
    if cfg["bf16_valu"] and jnp.dtype(mm_dtype) == jnp.dtype(jnp.bfloat16):
        return jnp.bfloat16
    return jnp.float32


def _round_up(v, m):
    return -(-v // m) * m


def _pick_tile(batch, block_b, two_core):
    """Pick a sublane/bf16-packing aligned batch tile size."""
    n_tiles = max(1, pl.cdiv(batch, block_b))
    if two_core and batch >= 1024:
        # Guarantee an even number of tiles >= 2 so both v7x TensorCores work.
        n_tiles = max(n_tiles, 2)
        if n_tiles % 2:
            n_tiles += 1
    tb = _round_up(pl.cdiv(batch, n_tiles), 16)
    if tb >= batch:
        tb = batch  # single tile: block == full array dim (always legal)
    return tb


# --------------------------------------------------------------------------- #
# Kernel
# --------------------------------------------------------------------------- #
def _critic_kernel(x_ref, w1_ref, b1_ref, w2_ref, b2_ref, w3_ref, out_ref,
                   *, mm_dtype, ep_dtype, vec_head):
    """Fused 3-layer MLP on one batch tile.

    x_ref:  (tb, D)  f32   (cast to mm_dtype in-kernel; avoids wrapper copy)
    w1_ref: (D, H)   mm_dtype
    b1_ref: (1, H)   ep_dtype
    w2_ref: (H, H)   mm_dtype
    b2_ref: (1, H)   ep_dtype
    w3_ref: (1, H) f32 row when vec_head (O == 1), else (H, O)
    out_ref:(tb, O)  f32
    """
    x = x_ref[...].astype(mm_dtype)

    # Layer 1: MXU matmul with f32 accumulation; epilogue in ep_dtype
    # (bf16 on v6e/v7x halves VALU filler; f32 on v5e / f32 configs).
    h1 = jnp.dot(x, w1_ref[...], preferred_element_type=jnp.float32)
    h1 = jnp.maximum(h1.astype(ep_dtype) + b1_ref[...], 0.0).astype(mm_dtype)

    # Layer 2.
    h2 = jnp.dot(h1, w2_ref[...], preferred_element_type=jnp.float32)
    h2 = jnp.maximum(h2.astype(ep_dtype) + b2_ref[...], 0.0)

    if vec_head:
        # Head (N=1): q[r] = sum_h h2[r, h] * w3[h].  Rides idle VPU/XLU slots
        # instead of a 128-lane-padded MXU matmul; kept in f32 for accuracy.
        out_ref[...] = jnp.sum(h2.astype(jnp.float32) * w3_ref[...],
                               axis=-1, keepdims=True)
    else:
        out_ref[...] = jnp.dot(h2.astype(w3_ref.dtype), w3_ref[...],
                               preferred_element_type=jnp.float32)


# --------------------------------------------------------------------------- #
# Wrapper
# --------------------------------------------------------------------------- #
def critic_forward(x, params, *, block_b=None):
    """Run the Critic forward pass with a single batch-tiled pallas_call.

    x:      (B, state_dim + action_dim) float32 (streamed as-is, no pad/cast copy)
    params: dict with w1 (D, H) [matmul dtype], b1 (1, H) f32,
            w2 (H, H) [matmul dtype], b2 (1, H) f32, w3 (H, O) f32
    returns (B,) float32 if output_dim == 1 else (B, O) float32
    """
    cfg = _hw_config()
    w1, b1, w2, b2, w3 = (params["w1"], params["b1"], params["w2"],
                          params["b2"], params["w3"])
    B, D = x.shape
    H = w1.shape[1]
    O = w3.shape[1]
    assert w1.shape[0] == D, (w1.shape, D)

    mm_dtype = w1.dtype
    ep_dtype = _epilogue_dtype(mm_dtype)
    # Tiny (1, H) casts; fold to constants under jit with static params.
    b1e = b1.astype(ep_dtype)
    b2e = b2.astype(ep_dtype)

    if block_b is None:
        block_b = cfg["block_b"]
    tb = _pick_tile(B, block_b, cfg["two_core"])
    grid = (pl.cdiv(B, tb),)

    const = lambda i: (0, 0)  # weights resident across grid steps
    vec_head = (O == 1)
    if vec_head:
        w3_arg = w3.astype(jnp.float32).reshape(1, H)   # (H,1) -> (1,H) row, f32
        w3_spec = pl.BlockSpec((1, H), const)
    else:
        w3_arg = w3
        w3_spec = pl.BlockSpec((H, O), const)

    kernel = functools.partial(_critic_kernel, mm_dtype=mm_dtype,
                               ep_dtype=ep_dtype, vec_head=vec_head)

    out = pl.pallas_call(
        kernel,
        out_shape=jax.ShapeDtypeStruct((B, O), jnp.float32),
        grid=grid,
        in_specs=[
            pl.BlockSpec((tb, D), lambda i: (i, 0)),    # x tile, streamed f32
            pl.BlockSpec((D, H), const),                # w1 (unpadded)
            pl.BlockSpec((1, H), const),                # b1
            pl.BlockSpec((H, H), const),                # w2
            pl.BlockSpec((1, H), const),                # b2
            w3_spec,                                    # head weight
        ],
        out_specs=pl.BlockSpec((tb, O), lambda i: (i, 0)),
        compiler_params=pltpu.CompilerParams(
            dimension_semantics=("parallel",),          # megacore-shardable axis
            vmem_limit_bytes=cfg["vmem_limit"],
        ),
    )(x, w1, b1e, w2, b2e, w3_arg)

    if vec_head:
        return out.reshape(-1)   # matches torch `x.view(-1)`
    return out


# --------------------------------------------------------------------------- #
# Params / reference
# --------------------------------------------------------------------------- #
def init_critic_params(key, state_dim, action_dim, hidden_size=256, output_dim=1,
                       dtype=jnp.bfloat16):
    """he_normal init matching nn.init.kaiming_normal_ semantics.

    Weights stored transposed vs torch ((in, out) layout) so the kernel computes
    y = x @ W + b.  fc1/fc2 weights use `dtype` (bf16 = native MXU dtype);
    biases and the small head weight stay f32.  No feature-dim padding.
    """
    d_in = state_dim + action_dim
    k1, k2, k3 = jax.random.split(key, 3)

    def he_normal(k, fan_in, fan_out, gain):
        std = gain / jnp.sqrt(jnp.float32(fan_in))
        return jax.random.normal(k, (fan_in, fan_out), jnp.float32) * std

    return {
        "w1": he_normal(k1, d_in, hidden_size, jnp.sqrt(2.0)).astype(dtype),
        "b1": jnp.zeros((1, hidden_size), jnp.float32),
        "w2": he_normal(k2, hidden_size, hidden_size, jnp.sqrt(2.0)).astype(dtype),
        "b2": jnp.zeros((1, hidden_size), jnp.float32),
        "w3": he_normal(k3, hidden_size, output_dim, 1.0),   # linear gain, f32
    }


def critic_reference(x, params, *, epilogue_dtype=jnp.float32):
    """Pure-JAX reference mirroring the kernel's precision recipe."""
    w1, b1, w2, b2, w3 = (params["w1"], params["b1"], params["w2"],
                          params["b2"], params["w3"])
    mm = w1.dtype
    h1 = jnp.dot(x.astype(mm), w1, preferred_element_type=jnp.float32)
    h1 = jnp.maximum(h1.astype(epilogue_dtype) + b1.astype(epilogue_dtype),
                     0.0).astype(mm)
    h2 = jnp.dot(h1, w2, preferred_element_type=jnp.float32)
    h2 = jnp.maximum(h2.astype(epilogue_dtype) + b2.astype(epilogue_dtype), 0.0)
    q = jnp.dot(h2.astype(jnp.float32), w3.astype(jnp.float32),
                preferred_element_type=jnp.float32)
    return q.reshape(-1) if q.shape[1] == 1 else q


# --------------------------------------------------------------------------- #
# Self-test
# --------------------------------------------------------------------------- #
if __name__ == "__main__":
    # Small shapes consistent with the module's forward.
    batch, state_dim, action_dim, hidden = 2, 8, 4, 32

    key = jax.random.PRNGKey(0)
    k_params, k_x, k_x2 = jax.random.split(key, 3)
    x = jax.random.normal(k_x, (batch, state_dim + action_dim), jnp.float32)

    # 1) f32 weights, single batch tile.
    p32 = init_critic_params(k_params, state_dim, action_dim,
                             hidden_size=hidden, output_dim=1, dtype=jnp.float32)
    q = jax.block_until_ready(critic_forward(x, p32))
    q_ref = critic_reference(x, p32, epilogue_dtype=_epilogue_dtype(jnp.float32))
    assert q.shape == (batch,), q.shape
    assert jnp.allclose(q, q_ref, atol=1e-4, rtol=1e-4), (q, q_ref)

    # 2) Default bf16-matmul path (f32 accumulation, generation-aware epilogue).
    pbf = init_critic_params(k_params, state_dim, action_dim,
                             hidden_size=hidden, output_dim=1, dtype=jnp.bfloat16)
    qb = jax.block_until_ready(critic_forward(x, pbf))
    qb_ref = critic_reference(x, pbf, epilogue_dtype=_epilogue_dtype(jnp.bfloat16))
    assert qb.shape == (batch,), qb.shape
    assert jnp.allclose(qb, qb_ref, atol=2e-2, rtol=2e-2), (qb, qb_ref)

    # 3) Batch-tiled path with a ragged final tile (B=300, block_b=128), f32.
    big_b = 300
    xb = jax.random.normal(k_x2, (big_b, state_dim + action_dim), jnp.float32)
    qt = jax.block_until_ready(critic_forward(xb, p32, block_b=128))
    qt_ref = critic_reference(xb, p32, epilogue_dtype=_epilogue_dtype(jnp.float32))
    assert qt.shape == (big_b,), qt.shape
    assert jnp.allclose(qt, qt_ref, atol=1e-4, rtol=1e-4), (qt, qt_ref)

    print("KERNEL_OK")
</pallas_src>

<mosaic_0001>
module attributes {stable_mosaic.version = 11 : i64} {
  func.func @_critic_kernel(%arg0: i32, %arg1: memref<2x12xf32, #tpu.memory_space<vmem>>, %arg2: memref<12x32xf32, #tpu.memory_space<vmem>>, %arg3: memref<1x32xf32, #tpu.memory_space<vmem>>, %arg4: memref<32x32xf32, #tpu.memory_space<vmem>>, %arg5: memref<1x32xf32, #tpu.memory_space<vmem>>, %arg6: memref<1x32xf32, #tpu.memory_space<vmem>>, %arg7: memref<2x1xf32, #tpu.memory_space<vmem>>) attributes {dimension_semantics = [#tpu.dimension_semantics<parallel>], iteration_bounds = array<i64: 1>, scalar_prefetch = 0 : i64, scratch_operands = 0 : i64, tpu.core_type = #tpu.core_type<tc>, window_params = [{transform_indices = @transform_0, window_bounds = array<i64: 2, 12>}, {pipeline_mode = #tpu.pipeline_mode<synchronous>, transform_indices = @transform_1, window_bounds = array<i64: 12, 32>}, {pipeline_mode = #tpu.pipeline_mode<synchronous>, transform_indices = @transform_2, window_bounds = array<i64: 1, 32>}, {pipeline_mode = #tpu.pipeline_mode<synchronous>, transform_indices = @transform_3, window_bounds = array<i64: 32, 32>}, {pipeline_mode = #tpu.pipeline_mode<synchronous>, transform_indices = @transform_4, window_bounds = array<i64: 1, 32>}, {pipeline_mode = #tpu.pipeline_mode<synchronous>, transform_indices = @transform_5, window_bounds = array<i64: 1, 32>}, {transform_indices = @transform_6, window_bounds = array<i64: 2, 1>}]} {
    %c0 = arith.constant 0 : index
    %c0_0 = arith.constant 0 : index
    %0 = vector.load %arg1[%c0, %c0_0] : memref<2x12xf32, #tpu.memory_space<vmem>>, vector<2x12xf32>
    %c0_1 = arith.constant 0 : index
    %c0_2 = arith.constant 0 : index
    %1 = vector.load %arg2[%c0_1, %c0_2] : memref<12x32xf32, #tpu.memory_space<vmem>>, vector<12x32xf32>
    %cst = arith.constant dense<0.000000e+00> : vector<2x32xf32>
    %2 = tpu.matmul %0, %1, %cst {dimension_numbers = #tpu.dot_dimension_numbers<[1], [0], [0], [1], [0, 0, 1, 1], [], []>} : vector<2x12xf32>, vector<12x32xf32>, vector<2x32xf32> -> vector<2x32xf32>
    %c0_3 = arith.constant 0 : index
    %c0_4 = arith.constant 0 : index
    %3 = vector.load %arg3[%c0_3, %c0_4] : memref<1x32xf32, #tpu.memory_space<vmem>>, vector<1x32xf32>
    %4 = vector.broadcast %3 : vector<1x32xf32> to vector<2x32xf32>
    %5 = arith.addf %2, %4 : vector<2x32xf32>
    %cst_5 = arith.constant 0.000000e+00 : f32
    %6 = vector.broadcast %cst_5 : f32 to vector<2x32xf32>
    %7 = arith.maximumf %5, %6 : vector<2x32xf32>
    %c0_6 = arith.constant 0 : index
    %c0_7 = arith.constant 0 : index
    %8 = vector.load %arg4[%c0_6, %c0_7] : memref<32x32xf32, #tpu.memory_space<vmem>>, vector<32x32xf32>
    %cst_8 = arith.constant dense<0.000000e+00> : vector<2x32xf32>
    %9 = tpu.matmul %7, %8, %cst_8 {dimension_numbers = #tpu.dot_dimension_numbers<[1], [0], [0], [1], [0, 0, 1, 1], [], []>} : vector<2x32xf32>, vector<32x32xf32>, vector<2x32xf32> -> vector<2x32xf32>
    %c0_9 = arith.constant 0 : index
    %c0_10 = arith.constant 0 : index
    %10 = vector.load %arg5[%c0_9, %c0_10] : memref<1x32xf32, #tpu.memory_space<vmem>>, vector<1x32xf32>
    %11 = vector.broadcast %10 : vector<1x32xf32> to vector<2x32xf32>
    %12 = arith.addf %9, %11 : vector<2x32xf32>
    %cst_11 = arith.constant 0.000000e+00 : f32
    %13 = vector.broadcast %cst_11 : f32 to vector<2x32xf32>
    %14 = arith.maximumf %12, %13 : vector<2x32xf32>
    %c0_12 = arith.constant 0 : index
    %c0_13 = arith.constant 0 : index
    %15 = vector.load %arg6[%c0_12, %c0_13] : memref<1x32xf32, #tpu.memory_space<vmem>>, vector<1x32xf32>
    %16 = vector.broadcast %15 : vector<1x32xf32> to vector<2x32xf32>
    %17 = arith.mulf %14, %16 : vector<2x32xf32>
    %cst_14 = arith.constant dense<0.000000e+00> : vector<2xf32>
    %18 = vector.multi_reduction <add>, %17, %cst_14 [1] : vector<2x32xf32> to vector<2xf32>
    %19 = vector.shape_cast %18 : vector<2xf32> to vector<2x1xf32>
    %c0_15 = arith.constant 0 : index
    %c0_16 = arith.constant 0 : index
    %20 = vector.load %arg7[%c0_15, %c0_16] : memref<2x1xf32, #tpu.memory_space<vmem>>, vector<2x1xf32>
    tpu.vector_store %arg7[%c0_15, %c0_16], %19 {strides = array<i32>} : memref<2x1xf32, #tpu.memory_space<vmem>>, vector<2x1xf32>,
    return
  }
  func.func @transform_0(%arg0: i32) -> (i32, i32) {
    %c0_i32 = arith.constant 0 : i32
    %c0_i32_0 = arith.constant 0 : i32
    return %arg0, %c0_i32 : i32, i32
  }
  func.func @transform_1(%arg0: i32) -> (i32, i32) {
    %c0_i32 = arith.constant 0 : i32
    %c0_i32_0 = arith.constant 0 : i32
    %c0_i32_1 = arith.constant 0 : i32
    return %c0_i32, %c0_i32_0 : i32, i32
  }
  func.func @transform_2(%arg0: i32) -> (i32, i32) {
    %c0_i32 = arith.constant 0 : i32
    %c0_i32_0 = arith.constant 0 : i32
    %c0_i32_1 = arith.constant 0 : i32
    return %c0_i32, %c0_i32_0 : i32, i32
  }
  func.func @transform_3(%arg0: i32) -> (i32, i32) {
    %c0_i32 = arith.constant 0 : i32
    %c0_i32_0 = arith.constant 0 : i32
    %c0_i32_1 = arith.constant 0 : i32
    return %c0_i32, %c0_i32_0 : i32, i32
  }
  func.func @transform_4(%arg0: i32) -> (i32, i32) {
    %c0_i32 = arith.constant 0 : i32
    %c0_i32_0 = arith.constant 0 : i32
    %c0_i32_1 = arith.constant 0 : i32
    return %c0_i32, %c0_i32_0 : i32, i32
  }
  func.func @transform_5(%arg0: i32) -> (i32, i32) {
    %c0_i32 = arith.constant 0 : i32
    %c0_i32_0 = arith.constant 0 : i32
    %c0_i32_1 = arith.constant 0 : i32
    return %c0_i32, %c0_i32_0 : i32, i32
  }
  func.func @transform_6(%arg0: i32) -> (i32, i32) {
    %c0_i32 = arith.constant 0 : i32
    %c0_i32_0 = arith.constant 0 : i32
    return %arg0, %c0_i32 : i32, i32
  }
}

</mosaic_0001>

<llo_original>
// kernel: tpu_custom_call.1
$region0: #{tpu_custom_call.1}
  #allocation0 [shape = 'u32[]', space=smem, size = 0x4, offset = 0x4, fixed_abs, tag = 'smem constant byte address 0x4 - core index']
  #allocation1 [shape = 'u32[144,128]{1,0:T(1,128)}', space=vmem, size = 0x12000, scoped, tag = 'internal scratch']
  %s0 = inlined_call_operand.hbm [shape: f32[2,12], index: 0, kind: input, shape index: {}]
  %s1 = inlined_call_operand.hbm [shape: f32[12,32], index: 1, kind: input, shape index: {}]
  %s2 = inlined_call_operand.vmem [shape: f32[1,32], index: 2, kind: input, shape index: {}]
  %s3 = inlined_call_operand.hbm [shape: f32[32,32], index: 3, kind: input, shape index: {}]
  %s4 = inlined_call_operand.vmem [shape: f32[1,32], index: 4, kind: input, shape index: {}]
  %s5 = inlined_call_operand.vmem [shape: f32[1,32], index: 5, kind: input, shape index: {}]
  %s6 = inlined_call_operand.vmem [shape: f32[2,1], index: 6, kind: output, shape index: {}]
  %s7 = sld [smem:[#allocation0]]
  $region46: #{tpu_custom_call.1} parent=0
    _
  %s9 = ssub.s32 1, %s7
  %s10 = scalar_select 0, %s9, %s7
  $region1: #{tpu_custom_call.1} parent=0
    #allocation2 [shape = 'u8[1024]{0}', space=vmem, size = 0x400, scoped, tag = 'input window, operand 0, single buffered']
    #allocation3 [shape = 's32[1]{0}', space=sflag, size = 0x4, scoped, tag = 'scoped memory for tpu_custom_call.1']
    #allocation4 [shape = 'u8[8192]{0}', space=vmem, size = 0x2000, scoped, tag = 'input window, operand 1, single buffered']
    #allocation5 [shape = 's32[1]{0}', space=sflag, size = 0x4, scoped, tag = 'scoped memory for tpu_custom_call.1']
    #allocation6 [shape = 'u8[16384]{0}', space=vmem, size = 0x4000, scoped, tag = 'input window, operand 3, single buffered']
    %11 = vsyncpa [#allocation3], 0
    %12 = vsyncpa [#allocation5], 0
    // Predicated region
    $region2: #{tpu_custom_call.1} parent=1 // pred_check
      _
    $region3: #{tpu_custom_call.1} parent=1 // pred_check_branch
      %14 = sbr.rel (0) target = $region5
    $region4: #{tpu_custom_call.1} parent=1 // pred_region
      %s16 = ssub.s32 32, 32
      %17 = vsyncadd [#allocation3], %s16
      %s19 = sshll.u32 [#allocation2], 4
      %s20 = int_to_ptr.vmem [resolvable:$true] %s19
      %22 = dma.hbm_to_vmem [thread:$0]  %s0, 32, %s20, [#allocation3]
    $region5: #{tpu_custom_call.1} parent=1 // pred_fallthru
      _
    // Predicated region
    $region6: #{tpu_custom_call.1} parent=1 // pred_check
      _
    $region7: #{tpu_custom_call.1} parent=1 // pred_check_branch
      %24 = sbr.rel (0) target = $region9
    $region8: #{tpu_custom_call.1} parent=1 // pred_region
      %s26 = ssub.s32 256, 256
      %27 = vsyncadd [#allocation5], %s26
      %s28 = sshll.u32 [#allocation4], 4
      %s29 = int_to_ptr.vmem [resolvable:$true] %s28
      %34 = dma.hbm_to_vmem [thread:$0]  %s1, 256, %s29, [#allocation5], 128, 128, 8
    $region9: #{tpu_custom_call.1} parent=1 // pred_fallthru
      _
    // Predicated region
    $region10: #{tpu_custom_call.1} parent=1 // pred_check
      _
    $region11: #{tpu_custom_call.1} parent=1 // pred_check_branch
      %36 = sbr.rel (0) target = $region13
    $region12: #{tpu_custom_call.1} parent=1 // pred_region
      _
    $region13: #{tpu_custom_call.1} parent=1 // pred_fallthru
      _
    // Predicated region
    $region14: #{tpu_custom_call.1} parent=1 // pred_check
      _
    $region15: #{tpu_custom_call.1} parent=1 // pred_check_branch
      %38 = sbr.rel (0) target = $region17
    $region16: #{tpu_custom_call.1} parent=1 // pred_region
      %s40 = ssub.s32 512, 512
      %41 = vsyncadd [#allocation5], %s40
      %s42 = sshll.u32 [#allocation6], 4
      %s43 = int_to_ptr.vmem [resolvable:$true] %s42
      %48 = dma.hbm_to_vmem [thread:$0]  %s3, 512, %s43, [#allocation5], 128, 128, 8
    $region17: #{tpu_custom_call.1} parent=1 // pred_fallthru
      _
    // Predicated region
    $region18: #{tpu_custom_call.1} parent=1 // pred_check
      _
    $region19: #{tpu_custom_call.1} parent=1 // pred_check_branch
      %50 = sbr.rel (0) target = $region21
    $region20: #{tpu_custom_call.1} parent=1 // pred_region
      _
    $region21: #{tpu_custom_call.1} parent=1 // pred_fallthru
      _
    // Predicated region
    $region22: #{tpu_custom_call.1} parent=1 // pred_check
      _
    $region23: #{tpu_custom_call.1} parent=1 // pred_check_branch
      %52 = sbr.rel (0) target = $region25
    $region24: #{tpu_custom_call.1} parent=1 // pred_region
      _
    $region25: #{tpu_custom_call.1} parent=1 // pred_fallthru
      _
    // Predicated region
    $region26: #{tpu_custom_call.1} parent=1 // pred_check
      _
    $region27: #{tpu_custom_call.1} parent=1 // pred_check_branch
      %54 = sbr.rel (0) target = $region29
    $region28: #{tpu_custom_call.1} parent=1 // pred_region
      %55 = dma.done [#allocation3], 32
    $region29: #{tpu_custom_call.1} parent=1 // pred_fallthru
      _
    // Predicated region
    $region30: #{tpu_custom_call.1} parent=1 // pred_check
      _
    $region31: #{tpu_custom_call.1} parent=1 // pred_check_branch
      %57 = sbr.rel (0) target = $region33
    $region32: #{tpu_custom_call.1} parent=1 // pred_region
      %58 = dma.done [#allocation5], 256
    $region33: #{tpu_custom_call.1} parent=1 // pred_fallthru
      _
    // Predicated region
    $region34: #{tpu_custom_call.1} parent=1 // pred_check
      _
    $region35: #{tpu_custom_call.1} parent=1 // pred_check_branch
      %60 = sbr.rel (0) target = $region37
    $region36: #{tpu_custom_call.1} parent=1 // pred_region
      %61 = dma.done [#allocation5], 512
    $region37: #{tpu_custom_call.1} parent=1 // pred_fallthru
      _
    %v62 = vld [vmem:[#allocation2] sm:$0x3]
    %v63 = vld [vmem:[#allocation4] sm:$0xff]
    %v64 = vld [vmem:[#allocation4 + $0x8] sm:$0xf]
    %v65 = vld [vmem:[%s2] sm:$0x1]
    %v67 = vlaneseq
    %v68 = vshrl.u32 %v67, 7
    %v69 = vsub.s32 0, %v68
    %v70 = vrot.slane %v65, %v69
    %vm72 = vcmask 97280
    %v74 = vsel %vm72, %v62, 0
    %vm76 = vcmask 1043456
    %v78 = vsel %vm76, %v64, 0
    %80 = vmatprep.subr.mxu0 0.0
    %81 = vmatpush1.msra.mxu0 %v63
    %82 = vmatprep.subr.mxu0 0.0
    %83 = vmatpush1.msra.mxu0 %v78
    %84 = vmatprep.subr.mxu0 0.0
    %85 = vmatpush1.msra.mxu0 0.0
    %86 = vmatprep.subr.mxu0 0.0
    %87 = vmatpush1.msra.mxu0 0.0
    %88 = vmatprep.subr.mxu0 0.0
    %89 = vmatpush1.msra.mxu0 0.0
    %90 = vmatprep.subr.mxu0 0.0
    %91 = vmatpush1.msra.mxu0 0.0
    %92 = vmatprep.subr.mxu0 0.0
    %93 = vmatpush1.msra.mxu0 0.0
    %94 = vmatprep.subr.mxu0 0.0
    %95 = vmatpush1.msra.mxu0 0.0
    %96 = vmatprep.subr.mxu0 0.0
    %97 = vmatpush1.msra.mxu0 0.0
    %98 = vmatprep.subr.mxu0 0.0
    %99 = vmatpush1.msra.mxu0 0.0
    %100 = vmatprep.subr.mxu0 0.0
    %101 = vmatpush1.msra.mxu0 0.0
    %102 = vmatprep.subr.mxu0 0.0
    %103 = vmatpush1.msra.mxu0 0.0
    %104 = vmatprep.subr.mxu0 0.0
    %105 = vmatpush1.msra.mxu0 0.0
    %106 = vmatprep.subr.mxu0 0.0
    %107 = vmatpush1.msra.mxu0 0.0
    %108 = vmatprep.subr.mxu0 0.0
    %109 = vmatpush1.msra.mxu0 0.0
    %110 = vmatprep.subr.mxu0 0.0
    %111 = vmatpush1.msra.mxu0 0.0
    %112 = vmatprep.subr.mxu0 0.0
    %113 = vmatpush1.msra.mxu0 0.0
    %114 = vmatprep.subr.mxu0 0.0
    %115 = vmatpush1.msra.mxu0 0.0
    %116 = vmatprep.subr.mxu0 0.0
    %117 = vmatpush1.msra.mxu0 0.0
    %118 = vmatprep.subr.mxu0 0.0
    %119 = vmatpush1.msra.mxu0 0.0
    %120 = vmatprep.subr.mxu0 0.0
    %121 = vmatpush1.msra.mxu0 0.0
    %122 = vmatprep.subr.mxu0 0.0
    %123 = vmatpush1.msra.mxu0 0.0
    %124 = vmatprep.subr.mxu0 0.0
    %125 = vmatpush1.msra.mxu0 0.0
    %126 = vmatprep.subr.mxu0 0.0
    %127 = vmatpush1.msra.mxu0 0.0
    %128 = vmatprep.subr.mxu0 0.0
    %129 = vmatpush1.msra.mxu0 0.0
    %130 = vmatprep.subr.mxu0 0.0
    %131 = vmatpush1.msra.mxu0 0.0
    %132 = vmatprep.subr.mxu0 0.0
    %133 = vmatpush1.msra.mxu0 0.0
    %134 = vmatprep.subr.mxu0 0.0
    %135 = vmatpush1.msra.mxu0 0.0
    %136 = vmatprep.subr.mxu0 0.0
    %137 = vmatpush1.msra.mxu0 0.0
    %138 = vmatprep.subr.mxu0 0.0
    %139 = vmatpush1.msra.mxu0 0.0
    %140 = vmatprep.subr.mxu0 0.0
    %141 = vmatpush1.msra.mxu0 0.0
    %142 = vmatprep.subr.mxu0 0.0
    %143 = vmatpush1.msra.mxu0 0.0
    %144 = vmatprep.mubr.f32.mxu0 0.0
    %145 = vmatmul.mubr.f32.gmra.mrb[0].mxu0 %v74
    %v146 = vpop.f32.mrb[0].mxu0
    %v147 = vadd.f32 %v70, %v146
    %v148 = vpop.f32.mrb[0].mxu0
    %149 = vdwg.mxu0
    %v150 = vmax.f32 %v147, 0.0
    %v151 = vld [vmem:[#allocation6] sm:$0xff]
    %v152 = vld [vmem:[#allocation6 + $0x8] sm:$0xff]
    %v153 = vld [vmem:[#allocation6 + $0x10] sm:$0xff]
    %v154 = vld [vmem:[#allocation6 + $0x18] sm:$0xff]
    %v155 = vld [vmem:[%s4] sm:$0x1]
    %v157 = vlaneseq
    %v158 = vshrl.u32 %v157, 7
    %v159 = vsub.s32 0, %v158
    %v160 = vrot.slane %v155, %v159
    %vm162 = vcmask 261120
    %v164 = vsel %vm162, %v150, 0
    %166 = vmatprep.subr.mxu0 0.0
    %167 = vmatpush1.msra.mxu0 %v151
    %168 = vmatprep.subr.mxu0 0.0
    %169 = vmatpush1.msra.mxu0 %v152
    %170 = vmatprep.subr.mxu0 0.0
    %171 = vmatpush1.msra.mxu0 %v153
    %172 = vmatprep.subr.mxu0 0.0
    %173 = vmatpush1.msra.mxu0 %v154
    %174 = vmatprep.subr.mxu0 0.0
    %175 = vmatpush1.msra.mxu0 0.0
    %176 = vmatprep.subr.mxu0 0.0
    %177 = vmatpush1.msra.mxu0 0.0
    %178 = vmatprep.subr.mxu0 0.0
    %179 = vmatpush1.msra.mxu0 0.0
    %180 = vmatprep.subr.mxu0 0.0
    %181 = vmatpush1.msra.mxu0 0.0
    %182 = vmatprep.subr.mxu0 0.0
    %183 = vmatpush1.msra.mxu0 0.0
    %184 = vmatprep.subr.mxu0 0.0
    %185 = vmatpush1.msra.mxu0 0.0
    %186 = vmatprep.subr.mxu0 0.0
    %187 = vmatpush1.msra.mxu0 0.0
    %188 = vmatprep.subr.mxu0 0.0
    %189 = vmatpush1.msra.mxu0 0.0
    %190 = vmatprep.subr.mxu0 0.0
    %191 = vmatpush1.msra.mxu0 0.0
    %192 = vmatprep.subr.mxu0 0.0
    %193 = vmatpush1.msra.mxu0 0.0
    %194 = vmatprep.subr.mxu0 0.0
    %195 = vmatpush1.msra.mxu0 0.0
    %196 = vmatprep.subr.mxu0 0.0
    %197 = vmatpush1.msra.mxu0 0.0
    %198 = vmatprep.subr.mxu0 0.0
    %199 = vmatpush1.msra.mxu0 0.0
    %200 = vmatprep.subr.mxu0 0.0
    %201 = vmatpush1.msra.mxu0 0.0
    %202 = vmatprep.subr.mxu0 0.0
    %203 = vmatpush1.msra.mxu0 0.0
    %204 = vmatprep.subr.mxu0 0.0
    %205 = vmatpush1.msra.mxu0 0.0
    %206 = vmatprep.subr.mxu0 0.0
    %207 = vmatpush1.msra.mxu0 0.0
    %208 = vmatprep.subr.mxu0 0.0
    %209 = vmatpush1.msra.mxu0 0.0
    %210 = vmatprep.subr.mxu0 0.0
    %211 = vmatpush1.msra.mxu0 0.0
    %212 = vmatprep.subr.mxu0 0.0
    %213 = vmatpush1.msra.mxu0 0.0
    %214 = vmatprep.subr.mxu0 0.0
    %215 = vmatpush1.msra.mxu0 0.0
    %216 = vmatprep.subr.mxu0 0.0
    %217 = vmatpush1.msra.mxu0 0.0
    %218 = vmatprep.subr.mxu0 0.0
    %219 = vmatpush1.msra.mxu0 0.0
    %220 = vmatprep.subr.mxu0 0.0
    %221 = vmatpush1.msra.mxu0 0.0
    %222 = vmatprep.subr.mxu0 0.0
    %223 = vmatpush1.msra.mxu0 0.0
    %224 = vmatprep.subr.mxu0 0.0
    %225 = vmatpush1.msra.mxu0 0.0
    %226 = vmatprep.subr.mxu0 0.0
    %227 = vmatpush1.msra.mxu0 0.0
    %228 = vmatprep.subr.mxu0 0.0
    %229 = vmatpush1.msra.mxu0 0.0
    %230 = vmatprep.mubr.f32.mxu0 0.0
    %231 = vmatmul.mubr.f32.gmra.mrb[0].mxu0 %v164
    %v232 = vpop.f32.mrb[0].mxu0
    %v233 = vadd.f32 %v160, %v232
    %v234 = vpop.f32.mrb[0].mxu0
    %235 = vdwg.mxu0
    %v236 = vmax.f32 %v233, 0.0
    %v237 = vld [vmem:[%s5] sm:$0x1]
    %v239 = vlaneseq
    %v240 = vshrl.u32 %v239, 7
    %v241 = vsub.s32 0, %v240
    %v242 = vrot.slane %v237, %v241
    %v244 = vmul.f32 %v236, %v242
    %vm245 = vcmask 254976
    %v246 = vsel %vm245, %v244, 0.0
    %247 = vadd.xlane.f32.xlu0 %v246
    %v248 = vpop.xlane.xlu0 %247
    %vm249 = vcmask 1024
    %250 = vst.msk [vmem:[%s6] sm:$0x3] %vm249, %v248
    // Predicated region
    $region38: #{tpu_custom_call.1} parent=1 // pred_check
      _
    $region39: #{tpu_custom_call.1} parent=1 // pred_check_branch
      %252 = sbr.rel (0) target = $region41
    $region40: #{tpu_custom_call.1} parent=1 // pred_region
      _
    $region41: #{tpu_custom_call.1} parent=1 // pred_fallthru
      _
    // Predicated region
    $region42: #{tpu_custom_call.1} parent=1 // pred_check
      _
    $region43: #{tpu_custom_call.1} parent=1 // pred_check_branch
      %254 = sbr.rel (0) target = $region45
    $region44: #{tpu_custom_call.1} parent=1 // pred_region
      _
    $region45: #{tpu_custom_call.1} parent=1 // pred_fallthru
      _
    %255 = vsyncpa [#allocation3], 1
    %256 = vsyncpa [#allocation5], 1

</llo_original>
